<compile_context>
chip_gen: v5e
topology: v5e:2x2
jax: 0.10.0
libtpu: 0.0.40
codegen_flags: <defaults>
</compile_context>

<pallas_src>
import functools

import jax
import jax.numpy as jnp
from jax.experimental import pallas as pl
from jax.experimental.pallas import tpu as pltpu

_TARGET_BLOCK_BYTES = 8 * 1024 * 1024   # ~8 MiB input block per grid step
_MAX_HW_TILE = 8192                     # lanes per spatial block (multiple of 128)
_MAX_ROWS_TILE = 8192                   # keeps the (rows_tile, 128) f32 accumulator <= 4 MiB


def _round_up(x, m):
    return ((x + m - 1) // m) * m


def _gap_kernel(x_ref, o_ref, *scratch, hw_total, hw_blocks):
    """x_ref: (rows_tile, hw_tile); o_ref: (rows_tile, 1); scratch: optional (rows_tile, 128) f32."""
    rows_t, hw_t = x_ref.shape
    inv = 1.0 / float(hw_total)

    def chunk(k):  # lane-aligned 128-wide chunk, cast on read (no full-tile f32 temp)
        return x_ref[:, k * 128:(k + 1) * 128].astype(jnp.float32)

    if hw_blocks == 1:
        # Whole spatial extent in one block: reduce and write out directly (no accumulator).
        nfull = hw_t // 128
        part = None
        for k in range(nfull):
            c = chunk(k)
            part = c if part is None else part + c
        total = None
        if part is not None:
            total = jnp.sum(part, axis=-1, keepdims=True)      # one XLU reduce per row tile
        rem_start = nfull * 128
        if rem_start < hw_t:                                    # static lane remainder (< 128)
            rsum = jnp.sum(x_ref[:, rem_start:hw_t].astype(jnp.float32),
                           axis=-1, keepdims=True)
            total = rsum if total is None else total + rsum
        o_ref[...] = (total * inv).astype(o_ref.dtype)
        return

    # Multi-block spatial reduction with a resident f32 accumulator.
    acc_ref = scratch[0]
    hw_i = pl.program_id(1)
    is_last = hw_i == hw_blocks - 1

    @pl.when(hw_i == 0)
    def _init():
        acc_ref[...] = jnp.zeros_like(acc_ref)

    nchunks = hw_t // 128                      # hw_t is a multiple of 128 here by construction
    has_tail = (hw_blocks * hw_t) != hw_total  # only the last block can contain padding

    def accumulate_full():
        part = chunk(0)
        for k in range(1, nchunks):
            part = part + chunk(k)
        acc_ref[...] += part

    if not has_tail:
        accumulate_full()
    else:
        base = (hw_blocks - 1) * hw_t          # static column offset of the last block
        valid = hw_total - base                # static: 0 < valid < hw_t
        k_full = valid // 128                  # full chunks in the last block
        rem = valid - k_full * 128             # straddling chunk width (< 128)

        @pl.when(hw_i < hw_blocks - 1)
        def _body_full():                      # non-last blocks: no masking at all
            accumulate_full()

        @pl.when(is_last)
        def _body_tail():                      # last block: static slices, padded lanes never read
            part = None
            for k in range(k_full):
                c = chunk(k)
                part = c if part is None else part + c
            if part is not None:
                acc_ref[...] += part
            if rem:
                tail = x_ref[:, k_full * 128:k_full * 128 + rem].astype(jnp.float32)
                acc_ref[:, 0:1] += jnp.sum(tail, axis=-1, keepdims=True)

    @pl.when(is_last)
    def _finalize():
        total = jnp.sum(acc_ref[...], axis=-1, keepdims=True)   # one XLU reduce per row tile
        o_ref[...] = (total * inv).astype(o_ref.dtype)


def global_avg_pool2d(x):
    """x: (N, C, H, W) -> (N, C), mean over spatial dims."""
    N, C, H, W = x.shape
    rows = N * C
    hw = H * W
    x2 = x.reshape(rows, hw)
    itemsize = x2.dtype.itemsize
    sub = {4: 8, 2: 16, 1: 32}.get(itemsize, 8)     # sublane multiple for the row-tile dim

    # ---- spatial (reduction) tiling: balanced, lane-aligned blocks ----
    n_hw0 = pl.cdiv(hw, _MAX_HW_TILE)
    if n_hw0 <= 1 or hw < 128:
        hw_tile, n_hw = hw, 1                       # full extent (legal even if unaligned)
    else:
        hw_tile = _round_up(pl.cdiv(hw, n_hw0), 128)
        n_hw = pl.cdiv(hw, hw_tile)
        if n_hw == 1:
            hw_tile = hw

    # ---- row tiling: fill ~TARGET bytes per step; >=2 row tiles when possible (v7x megacore) ----
    if rows <= sub:
        rows_tile = rows                            # full extent (legal)
    else:
        rt = _TARGET_BLOCK_BYTES // (hw_tile * itemsize)
        rt = max(sub, min(rt, _MAX_ROWS_TILE))
        rt = (rt // sub) * sub
        half = _round_up(pl.cdiv(rows, 2), sub)     # guarantee grid[0] >= 2 when rows allow it
        rows_tile = min(rt, half)

    grid = (pl.cdiv(rows, rows_tile), n_hw)

    scratch = []
    if n_hw > 1:
        scratch.append(pltpu.VMEM((rows_tile, 128), jnp.float32))

    # Scoped VMEM: 2 x double-buffered input block + accumulator + output (+ headroom).
    in_block_bytes = rows_tile * hw_tile * itemsize
    acc_bytes = rows_tile * 128 * 4 if n_hw > 1 else 0
    needed = 2 * in_block_bytes + acc_bytes + 2 * rows_tile * itemsize + (2 << 20)
    vmem_limit = int(min(max(needed, 32 * 1024 * 1024), 48 * 1024 * 1024))

    kernel = functools.partial(_gap_kernel, hw_total=hw, hw_blocks=n_hw)

    out = pl.pallas_call(
        kernel,
        out_shape=jax.ShapeDtypeStruct((rows, 1), x.dtype),
        grid_spec=pltpu.PrefetchScalarGridSpec(
            num_scalar_prefetch=0,
            grid=grid,
            in_specs=[pl.BlockSpec((rows_tile, hw_tile), lambda r, h: (r, h))],
            # Output block independent of the reduction axis -> resident across spatial steps.
            out_specs=pl.BlockSpec((rows_tile, 1), lambda r, h: (r, 0)),
            scratch_shapes=scratch,
        ),
        compiler_params=pltpu.CompilerParams(
            dimension_semantics=("parallel", "arbitrary"),
            vmem_limit_bytes=vmem_limit,
        ),
    )(x2)
    return out.reshape(N, C)


if __name__ == "__main__":
    key = jax.random.PRNGKey(0)
    N, C, H, W = 2, 4, 16, 16
    x = jax.random.normal(key, (N, C, H, W), dtype=jnp.float32)

    out = jax.block_until_ready(global_avg_pool2d(x))
    ref = jnp.mean(x, axis=(2, 3))
    assert out.shape == (N, C)
    assert jnp.allclose(out, ref, atol=1e-5, rtol=1e-5)

    # Extra coverage: tiny spatial (<128), unaligned single block with a lane remainder,
    # multiple / partial row tiles, the multi-block masked-tail path, and bf16 input.
    cases = [
        ((2, 4, 7, 7), jnp.float32),      # hw=49 (<128), darknet-head-like
        ((2, 4, 40, 40), jnp.float32),    # hw=1600, single block + 64-lane remainder
        ((3, 7, 13, 13), jnp.float32),    # rows=21 -> 2 row tiles, partial last row tile
        ((1, 8, 97, 97), jnp.float32),    # hw=9409 -> 2 spatial blocks + masked tail
        ((2, 8, 13, 13), jnp.bfloat16),   # bf16 input, f32 accumulation
    ]
    for idx, (shape, dt) in enumerate(cases):
        xi = jax.random.normal(jax.random.PRNGKey(idx + 1), shape, jnp.float32).astype(dt)
        oi = jax.block_until_ready(global_avg_pool2d(xi))
        ri = jnp.mean(xi.astype(jnp.float32), axis=(2, 3))
        tol = 1e-5 if dt == jnp.float32 else 2e-2
        assert oi.shape == shape[:2]
        assert jnp.allclose(oi.astype(jnp.float32), ri, atol=tol, rtol=tol)

    print("KERNEL_OK")
</pallas_src>

<mosaic_0001>
module attributes {stable_mosaic.version = 11 : i64} {
  func.func @_gap_kernel(%arg0: i32, %arg1: i32, %arg2: memref<8x256xf32, #tpu.memory_space<vmem>>, %arg3: memref<8x1xf32, #tpu.memory_space<vmem>>) attributes {dimension_semantics = [#tpu.dimension_semantics<parallel>, #tpu.dimension_semantics<arbitrary>], iteration_bounds = array<i64: 1, 1>, scalar_prefetch = 0 : i64, scratch_operands = 0 : i64, tpu.core_type = #tpu.core_type<tc>, window_params = [{transform_indices = @transform_0, window_bounds = array<i64: 8, 256>}, {transform_indices = @transform_1, window_bounds = array<i64: 8, 1>}]} {
    %c0 = arith.constant 0 : index
    %c0_0 = arith.constant 0 : index
    %0 = vector.load %arg2[%c0, %c0_0] : memref<8x256xf32, #tpu.memory_space<vmem>>, vector<8x128xf32>
    %c0_1 = arith.constant 0 : index
    %c128 = arith.constant 128 : index
    %1 = vector.load %arg2[%c0_1, %c128] : memref<8x256xf32, #tpu.memory_space<vmem>>, vector<8x128xf32>
    %2 = arith.addf %0, %1 : vector<8x128xf32>
    %cst = arith.constant dense<0.000000e+00> : vector<8xf32>
    %3 = vector.multi_reduction <add>, %2, %cst [1] : vector<8x128xf32> to vector<8xf32>
    %4 = vector.shape_cast %3 : vector<8xf32> to vector<8x1xf32>
    %cst_2 = arith.constant 3.906250e-03 : f32
    %5 = vector.broadcast %cst_2 : f32 to vector<8x1xf32>
    %6 = arith.mulf %4, %5 : vector<8x1xf32>
    %c0_3 = arith.constant 0 : index
    %c0_4 = arith.constant 0 : index
    %7 = vector.load %arg3[%c0_3, %c0_4] : memref<8x1xf32, #tpu.memory_space<vmem>>, vector<8x1xf32>
    tpu.vector_store %arg3[%c0_3, %c0_4], %6 {strides = array<i32>} : memref<8x1xf32, #tpu.memory_space<vmem>>, vector<8x1xf32>,
    return
  }
  func.func @transform_0(%arg0: i32, %arg1: i32) -> (i32, i32) {
    %c0_i32 = arith.constant 0 : i32
    return %arg0, %arg1 : i32, i32
  }
  func.func @transform_1(%arg0: i32, %arg1: i32) -> (i32, i32) {
    %c0_i32 = arith.constant 0 : i32
    %c0_i32_0 = arith.constant 0 : i32
    return %arg0, %c0_i32 : i32, i32
  }
}

</mosaic_0001>

<llo_original>
// kernel: tpu_custom_call.1
$region0: #{tpu_custom_call.1}
  #allocation0 [shape = 'u32[]', space=smem, size = 0x4, offset = 0x4, fixed_abs, tag = 'smem constant byte address 0x4 - core index']
  #allocation1 [shape = 'u32[72,128]{1,0:T(1,128)}', space=vmem, size = 0x9000, scoped, tag = 'internal scratch']
  %s0 = inlined_call_operand.hbm [shape: f32[8,256], index: 0, kind: input, shape index: {}]
  %s1 = inlined_call_operand.vmem [shape: f32[8,1], index: 1, kind: output, shape index: {}]
  %s2 = sld [smem:[#allocation0]]
  $region18: #{tpu_custom_call.1} parent=0
    _
  %s4 = ssub.s32 1, %s2
  %s5 = scalar_select 0, %s4, %s2
  $region1: #{tpu_custom_call.1} parent=0
    #allocation2 [shape = 'u8[8192]{0}', space=vmem, size = 0x2000, scoped, tag = 'input window, operand 0, single buffered']
    #allocation3 [shape = 's32[1]{0}', space=sflag, size = 0x4, scoped, tag = 'scoped memory for tpu_custom_call.1']
    %6 = vsyncpa [#allocation3], 0
    // Predicated region
    $region2: #{tpu_custom_call.1} parent=1 // pred_check
      _
    $region3: #{tpu_custom_call.1} parent=1 // pred_check_branch
      %8 = sbr.rel (0) target = $region5
    $region4: #{tpu_custom_call.1} parent=1 // pred_region
      %10 = vsyncadd [#allocation3], 0
      %s12 = sshll.u32 %s0, 4
      %s13 = int_to_ptr.hbm [resolvable:$true] %s12
      %s14 = sshll.u32 [#allocation2], 4
      %s15 = int_to_ptr.vmem [resolvable:$true] %s14
      %17 = dma.hbm_to_vmem [thread:$0]  %s13, 256, %s15, [#allocation3]
    $region5: #{tpu_custom_call.1} parent=1 // pred_fallthru
      _
    // Predicated region
    $region6: #{tpu_custom_call.1} parent=1 // pred_check
      _
    $region7: #{tpu_custom_call.1} parent=1 // pred_check_branch
      %19 = sbr.rel (0) target = $region9
    $region8: #{tpu_custom_call.1} parent=1 // pred_region
      %21 = dma.done [#allocation3], 256
    $region9: #{tpu_custom_call.1} parent=1 // pred_fallthru
      _
    %v22 = vld [vmem:[#allocation2] sm:$0xff]
    %v23 = vld [vmem:[#allocation2 + $0x8] sm:$0xff]
    %v24 = vadd.f32 %v22, %v23
    %25 = vadd.xlane.f32.xlu0 %v24
    %v26 = vpop.xlane.xlu0 %25
    %v27 = vmul.f32 %v26, 0.00390625
    %vm28 = vcmask 7168
    %29 = vst.msk [vmem:[%s1] sm:$0xff] %vm28, %v27
    // Predicated region
    $region10: #{tpu_custom_call.1} parent=1 // pred_check
      _
    $region11: #{tpu_custom_call.1} parent=1 // pred_check_branch
      %31 = sbr.rel (0) target = $region13
    $region12: #{tpu_custom_call.1} parent=1 // pred_region
      _
    $region13: #{tpu_custom_call.1} parent=1 // pred_fallthru
      _
    // Predicated region
    $region14: #{tpu_custom_call.1} parent=1 // pred_check
      _
    $region15: #{tpu_custom_call.1} parent=1 // pred_check_branch
      %33 = sbr.rel (0) target = $region17
    $region16: #{tpu_custom_call.1} parent=1 // pred_region
      _
    $region17: #{tpu_custom_call.1} parent=1 // pred_fallthru
      _
    %34 = vsyncpa [#allocation3], 1

</llo_original>
